<compile_context>
chip_gen: v5e
topology: v5e:2x2
jax: 0.10.0
libtpu: 0.0.40
codegen_flags: <defaults>
</compile_context>

<pallas_src>
import functools

import jax
import jax.numpy as jnp
from jax.experimental import pallas as pl
from jax.experimental.pallas import tpu as pltpu

LANE = 128
SUBLANE = 8


def _cdiv(a, b):
    return -(-a // b)


def _round_up(n, m):
    return _cdiv(n, m) * m


def qnetwork_kernel(x_ref, w1_ref, b1_ref, w2_ref, b2_ref, w3_ref, b3_ref, o_ref):
    # Whole MLP fused per batch tile, feature-major: h^T = W^T @ x^T on the MXU
    # with f32 accumulation; bias-add + ReLU on the VPU in f32.
    xt = x_ref[...]                                                    # (in_p, tb)
    h1 = jnp.dot(w1_ref[...], xt, preferred_element_type=jnp.float32) + b1_ref[...]
    h1 = jnp.maximum(h1, 0.0)                                          # (h1p, tb)
    h2 = jnp.dot(w2_ref[...], h1.astype(w2_ref.dtype),
                 preferred_element_type=jnp.float32) + b2_ref[...]
    h2 = jnp.maximum(h2, 0.0)                                          # (h2p, tb)
    out = jnp.dot(w3_ref[...], h2.astype(w3_ref.dtype),
                  preferred_element_type=jnp.float32) + b3_ref[...]    # (out_p, tb)
    o_ref[...] = out.astype(o_ref.dtype)


def pad_params(params, compute_dtype=jnp.float32):
    """Transpose weights to feature-major [out, in] and zero-pad.

    Hidden widths -> multiples of 128; input width and output head -> multiples of
    8 sublanes only (the output head is NOT lane-padded -- that was the dominant
    HBM-writeback cost).  Zero-padded rows/cols/biases keep results bit-identical
    through the ReLUs.  Original params store y = x @ W + b with W of shape
    [in_features, out_features] (== PyTorch x @ W.T + b).
    """
    w1, b1, w2, b2, w3, b3 = (params[k] for k in ("w1", "b1", "w2", "b2", "w3", "b3"))
    in_p = _round_up(w1.shape[0], SUBLANE)
    h1p = _round_up(w1.shape[1], LANE)
    h2p = _round_up(w2.shape[1], LANE)
    out_p = _round_up(w3.shape[1], SUBLANE)

    def pad2(a, r, c):
        return jnp.pad(a, ((0, r - a.shape[0]), (0, c - a.shape[1])))

    padded = {
        "w1": pad2(w1.T, h1p, in_p).astype(compute_dtype),
        "b1": pad2(b1.T, h1p, 1).astype(jnp.float32),
        "w2": pad2(w2.T, h2p, h1p).astype(compute_dtype),
        "b2": pad2(b2.T, h2p, 1).astype(jnp.float32),
        "w3": pad2(w3.T, out_p, h2p).astype(compute_dtype),
        "b3": pad2(b3.T, out_p, 1).astype(jnp.float32),
    }
    return padded, w3.shape[1]  # padded params, true out_dims


def _choose_batch_tiling(B, batch_tile):
    """Pick (tb, b_pad) with tb a multiple of 128 (batch is the lane axis).

    - At least cdiv(B, batch_tile) grid steps (bounds per-tile VMEM / exposes DMA
      pipelining for huge B).
    - Force >= 2 steps whenever B > 128 so megacore sharding engages on v7x.
    - Never more steps than cdiv(B, 128) (tiles cannot be narrower than 128 lanes),
      and tb is sized to cdiv(B, n_steps) so b_pad never overshoots by ~2x.
    """
    max_steps = max(1, _cdiv(B, LANE))
    want_steps = _cdiv(B, batch_tile)
    if B > LANE:
        want_steps = max(want_steps, 2)
    n_steps = min(max_steps, want_steps)
    tb = _round_up(_cdiv(B, n_steps), LANE)
    b_pad = _round_up(B, tb)
    return tb, b_pad


def qnetwork_forward(x, padded_params, out_dims, *, batch_tile=2048):
    """x: [B, input_dims]. padded_params: output of pad_params. Returns [B, out_dims] f32."""
    p = padded_params
    w1, b1, w2, b2, w3, b3 = (p[k] for k in ("w1", "b1", "w2", "b2", "w3", "b3"))
    h1p, in_p = w1.shape
    h2p = w2.shape[0]
    out_p = w3.shape[0]

    B, in_dims = x.shape
    assert in_dims <= in_p, (in_dims, in_p)
    tb, b_pad = _choose_batch_tiling(B, batch_tile)
    grid = (b_pad // tb,)

    # Feature-major activations: batch on the lane axis; zero-pad input features
    # to in_p sublanes and batch to b_pad lanes (one fused XLA transpose+pad).
    xt = jnp.pad(x.T.astype(w1.dtype), ((0, in_p - in_dims), (0, b_pad - B)))

    def resident(shape):
        # Weights/biases: same block every grid step -> stay in VMEM, no re-DMA.
        return pl.BlockSpec(shape, lambda i: (0, 0))

    out_t = pl.pallas_call(
        qnetwork_kernel,
        out_shape=jax.ShapeDtypeStruct((out_p, b_pad), jnp.float32),
        grid=grid,
        in_specs=[
            pl.BlockSpec((in_p, tb), lambda i: (0, i)),   # x^T: pipelined over batch
            resident((h1p, in_p)), resident((h1p, 1)),
            resident((h2p, h1p)), resident((h2p, 1)),
            resident((out_p, h2p)), resident((out_p, 1)),
        ],
        out_specs=pl.BlockSpec((out_p, tb), lambda i: (0, i)),  # only 8 sublanes wide
        compiler_params=pltpu.CompilerParams(
            dimension_semantics=("parallel",),   # batch steps shard across TCs (v7x)
        ),
    )(xt, w1, b1, w2, b2, w3, b3)

    return out_t[:out_dims, :B].T


def qnetwork_apply(x, params, padded_params, out_dims, *, min_pallas_batch=65,
                   batch_tile=2048):
    """Dispatch: tiny RL-inference batches skip the kernel (plain XLA fuses the
    three small matmuls and beats pallas launch/drain cost at B < ~64)."""
    if x.shape[0] < min_pallas_batch:
        return reference_forward(x, params)
    return qnetwork_forward(x, padded_params, out_dims, batch_tile=batch_tile)


def init_params(key, input_dims, output_dims, fc1_dims=50, fc2_dims=50):
    # Deterministic PyTorch-like uniform fan-in init, weights stored [in, out].
    ks = jax.random.split(key, 6)

    def lin(kw, kb, fan_in, fan_out):
        bound = 1.0 / jnp.sqrt(fan_in)
        w = jax.random.uniform(kw, (fan_in, fan_out), jnp.float32, -bound, bound)
        b = jax.random.uniform(kb, (1, fan_out), jnp.float32, -bound, bound)
        return w, b

    w1, b1 = lin(ks[0], ks[1], input_dims, fc1_dims)
    w2, b2 = lin(ks[2], ks[3], fc1_dims, fc2_dims)
    w3, b3 = lin(ks[4], ks[5], fc2_dims, output_dims)
    return {"w1": w1, "b1": b1, "w2": w2, "b2": b2, "w3": w3, "b3": b3}


def reference_forward(x, p):
    h1 = jnp.maximum(x @ p["w1"] + p["b1"], 0.0)
    h2 = jnp.maximum(h1 @ p["w2"] + p["b2"], 0.0)
    return h2 @ p["w3"] + p["b3"]


# TODO(synk): Adam optimizer and checkpoint save/load from the PyTorch module are
# host-side training utilities, not part of the forward pass; not implemented here.

if __name__ == "__main__":
    key = jax.random.PRNGKey(0)
    k_x, k_p, k_x2 = jax.random.split(key, 3)

    input_dims = 8     # observation dim
    output_dims = 4    # number of actions
    params = init_params(k_p, input_dims, output_dims)

    # Pad/transpose once at parameter-preparation time (not per forward call).
    padded, out_dims = pad_params(params, compute_dtype=jnp.float32)
    fwd = functools.partial(qnetwork_forward, out_dims=out_dims)

    # Small RL-style batch: single grid step.
    x_small = jax.random.normal(k_x, (8, input_dims), jnp.float32)
    out_small = jax.block_until_ready(fwd(x_small, padded))
    ref_small = reference_forward(x_small, params)
    assert out_small.shape == (8, output_dims), out_small.shape
    assert jnp.allclose(out_small, ref_small, atol=1e-5, rtol=1e-5)

    # Larger batch: exercises adaptive tiling and a 2-step (megacore-eligible) grid.
    x_big = jax.random.normal(k_x2, (300, input_dims), jnp.float32)
    out_big = jax.block_until_ready(fwd(x_big, padded))
    ref_big = reference_forward(x_big, params)
    assert out_big.shape == (300, output_dims), out_big.shape
    assert jnp.allclose(out_big, ref_big, atol=1e-5, rtol=1e-5)

    print("KERNEL_OK")
</pallas_src>

<mosaic_0001>
module attributes {stable_mosaic.version = 11 : i64} {
  func.func @qnetwork_kernel(%arg0: i32, %arg1: memref<8x128xf32, #tpu.memory_space<vmem>>, %arg2: memref<128x8xf32, #tpu.memory_space<vmem>>, %arg3: memref<128x1xf32, #tpu.memory_space<vmem>>, %arg4: memref<128x128xf32, #tpu.memory_space<vmem>>, %arg5: memref<128x1xf32, #tpu.memory_space<vmem>>, %arg6: memref<8x128xf32, #tpu.memory_space<vmem>>, %arg7: memref<8x1xf32, #tpu.memory_space<vmem>>, %arg8: memref<8x128xf32, #tpu.memory_space<vmem>>) attributes {dimension_semantics = [#tpu.dimension_semantics<parallel>], iteration_bounds = array<i64: 1>, scalar_prefetch = 0 : i64, scratch_operands = 0 : i64, tpu.core_type = #tpu.core_type<tc>, window_params = [{transform_indices = @transform_0, window_bounds = array<i64: 8, 128>}, {pipeline_mode = #tpu.pipeline_mode<synchronous>, transform_indices = @transform_1, window_bounds = array<i64: 128, 8>}, {pipeline_mode = #tpu.pipeline_mode<synchronous>, transform_indices = @transform_2, window_bounds = array<i64: 128, 1>}, {pipeline_mode = #tpu.pipeline_mode<synchronous>, transform_indices = @transform_3, window_bounds = array<i64: 128, 128>}, {pipeline_mode = #tpu.pipeline_mode<synchronous>, transform_indices = @transform_4, window_bounds = array<i64: 128, 1>}, {pipeline_mode = #tpu.pipeline_mode<synchronous>, transform_indices = @transform_5, window_bounds = array<i64: 8, 128>}, {pipeline_mode = #tpu.pipeline_mode<synchronous>, transform_indices = @transform_6, window_bounds = array<i64: 8, 1>}, {transform_indices = @transform_7, window_bounds = array<i64: 8, 128>}]} {
    %c0 = arith.constant 0 : index
    %c0_0 = arith.constant 0 : index
    %0 = vector.load %arg1[%c0, %c0_0] : memref<8x128xf32, #tpu.memory_space<vmem>>, vector<8x128xf32>
    %c0_1 = arith.constant 0 : index
    %c0_2 = arith.constant 0 : index
    %1 = vector.load %arg2[%c0_1, %c0_2] : memref<128x8xf32, #tpu.memory_space<vmem>>, vector<128x8xf32>
    %cst = arith.constant dense<0.000000e+00> : vector<128x128xf32>
    %2 = tpu.matmul %1, %0, %cst {dimension_numbers = #tpu.dot_dimension_numbers<[1], [0], [0], [1], [0, 0, 1, 1], [], []>} : vector<128x8xf32>, vector<8x128xf32>, vector<128x128xf32> -> vector<128x128xf32>
    %c0_3 = arith.constant 0 : index
    %c0_4 = arith.constant 0 : index
    %3 = vector.load %arg3[%c0_3, %c0_4] : memref<128x1xf32, #tpu.memory_space<vmem>>, vector<128x1xf32>
    %4 = vector.broadcast %3 : vector<128x1xf32> to vector<128x128xf32>
    %5 = arith.addf %2, %4 : vector<128x128xf32>
    %cst_5 = arith.constant 0.000000e+00 : f32
    %6 = vector.broadcast %cst_5 : f32 to vector<128x128xf32>
    %7 = arith.maximumf %5, %6 : vector<128x128xf32>
    %c0_6 = arith.constant 0 : index
    %c0_7 = arith.constant 0 : index
    %8 = vector.load %arg4[%c0_6, %c0_7] : memref<128x128xf32, #tpu.memory_space<vmem>>, vector<128x128xf32>
    %cst_8 = arith.constant dense<0.000000e+00> : vector<128x128xf32>
    %9 = tpu.matmul %8, %7, %cst_8 {dimension_numbers = #tpu.dot_dimension_numbers<[1], [0], [0], [1], [0, 0, 1, 1], [], []>} : vector<128x128xf32>, vector<128x128xf32>, vector<128x128xf32> -> vector<128x128xf32>
    %c0_9 = arith.constant 0 : index
    %c0_10 = arith.constant 0 : index
    %10 = vector.load %arg5[%c0_9, %c0_10] : memref<128x1xf32, #tpu.memory_space<vmem>>, vector<128x1xf32>
    %11 = vector.broadcast %10 : vector<128x1xf32> to vector<128x128xf32>
    %12 = arith.addf %9, %11 : vector<128x128xf32>
    %cst_11 = arith.constant 0.000000e+00 : f32
    %13 = vector.broadcast %cst_11 : f32 to vector<128x128xf32>
    %14 = arith.maximumf %12, %13 : vector<128x128xf32>
    %c0_12 = arith.constant 0 : index
    %c0_13 = arith.constant 0 : index
    %15 = vector.load %arg6[%c0_12, %c0_13] : memref<8x128xf32, #tpu.memory_space<vmem>>, vector<8x128xf32>
    %cst_14 = arith.constant dense<0.000000e+00> : vector<8x128xf32>
    %16 = tpu.matmul %15, %14, %cst_14 {dimension_numbers = #tpu.dot_dimension_numbers<[1], [0], [0], [1], [0, 0, 1, 1], [], []>} : vector<8x128xf32>, vector<128x128xf32>, vector<8x128xf32> -> vector<8x128xf32>
    %c0_15 = arith.constant 0 : index
    %c0_16 = arith.constant 0 : index
    %17 = vector.load %arg7[%c0_15, %c0_16] : memref<8x1xf32, #tpu.memory_space<vmem>>, vector<8x1xf32>
    %18 = vector.broadcast %17 : vector<8x1xf32> to vector<8x128xf32>
    %19 = arith.addf %16, %18 : vector<8x128xf32>
    %c0_17 = arith.constant 0 : index
    %c0_18 = arith.constant 0 : index
    %20 = vector.load %arg8[%c0_17, %c0_18] : memref<8x128xf32, #tpu.memory_space<vmem>>, vector<8x128xf32>
    tpu.vector_store %arg8[%c0_17, %c0_18], %19 {strides = array<i32>} : memref<8x128xf32, #tpu.memory_space<vmem>>, vector<8x128xf32>,
    return
  }
  func.func @transform_0(%arg0: i32) -> (i32, i32) {
    %c0_i32 = arith.constant 0 : i32
    %c0_i32_0 = arith.constant 0 : i32
    return %c0_i32, %arg0 : i32, i32
  }
  func.func @transform_1(%arg0: i32) -> (i32, i32) {
    %c0_i32 = arith.constant 0 : i32
    %c0_i32_0 = arith.constant 0 : i32
    %c0_i32_1 = arith.constant 0 : i32
    return %c0_i32, %c0_i32_0 : i32, i32
  }
  func.func @transform_2(%arg0: i32) -> (i32, i32) {
    %c0_i32 = arith.constant 0 : i32
    %c0_i32_0 = arith.constant 0 : i32
    %c0_i32_1 = arith.constant 0 : i32
    return %c0_i32, %c0_i32_0 : i32, i32
  }
  func.func @transform_3(%arg0: i32) -> (i32, i32) {
    %c0_i32 = arith.constant 0 : i32
    %c0_i32_0 = arith.constant 0 : i32
    %c0_i32_1 = arith.constant 0 : i32
    return %c0_i32, %c0_i32_0 : i32, i32
  }
  func.func @transform_4(%arg0: i32) -> (i32, i32) {
    %c0_i32 = arith.constant 0 : i32
    %c0_i32_0 = arith.constant 0 : i32
    %c0_i32_1 = arith.constant 0 : i32
    return %c0_i32, %c0_i32_0 : i32, i32
  }
  func.func @transform_5(%arg0: i32) -> (i32, i32) {
    %c0_i32 = arith.constant 0 : i32
    %c0_i32_0 = arith.constant 0 : i32
    %c0_i32_1 = arith.constant 0 : i32
    return %c0_i32, %c0_i32_0 : i32, i32
  }
  func.func @transform_6(%arg0: i32) -> (i32, i32) {
    %c0_i32 = arith.constant 0 : i32
    %c0_i32_0 = arith.constant 0 : i32
    %c0_i32_1 = arith.constant 0 : i32
    return %c0_i32, %c0_i32_0 : i32, i32
  }
  func.func @transform_7(%arg0: i32) -> (i32, i32) {
    %c0_i32 = arith.constant 0 : i32
    %c0_i32_0 = arith.constant 0 : i32
    return %c0_i32, %arg0 : i32, i32
  }
}

</mosaic_0001>

<llo_original>
// kernel: tpu_custom_call.1
$region0: #{tpu_custom_call.1}
  #allocation0 [shape = 'u32[]', space=smem, size = 0x4, offset = 0x4, fixed_abs, tag = 'smem constant byte address 0x4 - core index']
  #allocation1 [shape = 'u32[72,128]{1,0:T(1,128)}', space=vmem, size = 0x9000, scoped, tag = 'internal scratch']
  %s0 = inlined_call_operand.vmem [shape: f32[8,128], index: 0, kind: input, shape index: {}]
  %s1 = inlined_call_operand.vmem [shape: f32[128,8], index: 1, kind: input, shape index: {}]
  %s2 = inlined_call_operand.vmem [shape: f32[128,1], index: 2, kind: input, shape index: {}]
  %s3 = inlined_call_operand.vmem [shape: f32[128,128], index: 3, kind: input, shape index: {}]
  %s4 = inlined_call_operand.vmem [shape: f32[128,1], index: 4, kind: input, shape index: {}]
  %s5 = inlined_call_operand.vmem [shape: f32[8,128], index: 5, kind: input, shape index: {}]
  %s6 = inlined_call_operand.vmem [shape: f32[8,1], index: 6, kind: input, shape index: {}]
  %s7 = inlined_call_operand.hbm [shape: f32[8,128], index: 7, kind: output, shape index: {}]
  %s8 = sld [smem:[#allocation0]]
  $region38: #{tpu_custom_call.1} parent=0
    _
  %s10 = ssub.s32 1, %s8
  %s11 = scalar_select 0, %s10, %s8
  $region1: #{tpu_custom_call.1} parent=0
    #allocation2 [shape = 'u8[4096]{0}', space=vmem, size = 0x1000, scoped, tag = 'output window, operand 0, single buffered']
    #allocation3 [shape = 's32[1]{0}', space=sflag, size = 0x4, scoped, tag = 'scoped memory for tpu_custom_call.1']
    %12 = vsyncpa [#allocation3], 0
    // Predicated region
    $region2: #{tpu_custom_call.1} parent=1 // pred_check
      _
    $region3: #{tpu_custom_call.1} parent=1 // pred_check_branch
      %14 = sbr.rel (0) target = $region5
    $region4: #{tpu_custom_call.1} parent=1 // pred_region
      _
    $region5: #{tpu_custom_call.1} parent=1 // pred_fallthru
      _
    // Predicated region
    $region6: #{tpu_custom_call.1} parent=1 // pred_check
      _
    $region7: #{tpu_custom_call.1} parent=1 // pred_check_branch
      %16 = sbr.rel (0) target = $region9
    $region8: #{tpu_custom_call.1} parent=1 // pred_region
      _
    $region9: #{tpu_custom_call.1} parent=1 // pred_fallthru
      _
    // Predicated region
    $region10: #{tpu_custom_call.1} parent=1 // pred_check
      _
    $region11: #{tpu_custom_call.1} parent=1 // pred_check_branch
      %18 = sbr.rel (0) target = $region13
    $region12: #{tpu_custom_call.1} parent=1 // pred_region
      _
    $region13: #{tpu_custom_call.1} parent=1 // pred_fallthru
      _
    // Predicated region
    $region14: #{tpu_custom_call.1} parent=1 // pred_check
      _
    $region15: #{tpu_custom_call.1} parent=1 // pred_check_branch
      %20 = sbr.rel (0) target = $region17
    $region16: #{tpu_custom_call.1} parent=1 // pred_region
      _
    $region17: #{tpu_custom_call.1} parent=1 // pred_fallthru
      _
    // Predicated region
    $region18: #{tpu_custom_call.1} parent=1 // pred_check
      _
    $region19: #{tpu_custom_call.1} parent=1 // pred_check_branch
      %22 = sbr.rel (0) target = $region21
    $region20: #{tpu_custom_call.1} parent=1 // pred_region
      _
    $region21: #{tpu_custom_call.1} parent=1 // pred_fallthru
      _
    // Predicated region
    $region22: #{tpu_custom_call.1} parent=1 // pred_check
      _
    $region23: #{tpu_custom_call.1} parent=1 // pred_check_branch
      %24 = sbr.rel (0) target = $region25
    $region24: #{tpu_custom_call.1} parent=1 // pred_region
      _
    $region25: #{tpu_custom_call.1} parent=1 // pred_fallthru
      _
    // Predicated region
    $region26: #{tpu_custom_call.1} parent=1 // pred_check
      _
    $region27: #{tpu_custom_call.1} parent=1 // pred_check_branch
      %26 = sbr.rel (0) target = $region29
    $region28: #{tpu_custom_call.1} parent=1 // pred_region
      _
    $region29: #{tpu_custom_call.1} parent=1 // pred_fallthru
      _
    %v27 = vld [vmem:[%s0] sm:$0xff]
    %v28 = vld [vmem:[%s1] sm:$0xff]
    %v29 = vld [vmem:[%s1 + $0x8] sm:$0xff]
    %v30 = vld [vmem:[%s1 + $0x10] sm:$0xff]
    %v31 = vld [vmem:[%s1 + $0x18] sm:$0xff]
    %v32 = vld [vmem:[%s1 + $0x20] sm:$0xff]
    %v33 = vld [vmem:[%s1 + $0x28] sm:$0xff]
    %v34 = vld [vmem:[%s1 + $0x30] sm:$0xff]
    %v35 = vld [vmem:[%s1 + $0x38] sm:$0xff]
    %v36 = vld [vmem:[%s1 + $0x40] sm:$0xff]
    %v37 = vld [vmem:[%s1 + $0x48] sm:$0xff]
    %v38 = vld [vmem:[%s1 + $0x50] sm:$0xff]
    %v39 = vld [vmem:[%s1 + $0x58] sm:$0xff]
    %v40 = vld [vmem:[%s1 + $0x60] sm:$0xff]
    %v41 = vld [vmem:[%s1 + $0x68] sm:$0xff]
    %v42 = vld [vmem:[%s1 + $0x70] sm:$0xff]
    %v43 = vld [vmem:[%s1 + $0x78] sm:$0xff]
    %v44 = vld [vmem:[%s2] sm:$0xff]
    %v45 = vld [vmem:[%s2 + $0x8] sm:$0xff]
    %v46 = vld [vmem:[%s2 + $0x10] sm:$0xff]
    %v47 = vld [vmem:[%s2 + $0x18] sm:$0xff]
    %v48 = vld [vmem:[%s2 + $0x20] sm:$0xff]
    %v49 = vld [vmem:[%s2 + $0x28] sm:$0xff]
    %v50 = vld [vmem:[%s2 + $0x30] sm:$0xff]
    %v51 = vld [vmem:[%s2 + $0x38] sm:$0xff]
    %v52 = vld [vmem:[%s2 + $0x40] sm:$0xff]
    %v53 = vld [vmem:[%s2 + $0x48] sm:$0xff]
    %v54 = vld [vmem:[%s2 + $0x50] sm:$0xff]
    %v55 = vld [vmem:[%s2 + $0x58] sm:$0xff]
    %v56 = vld [vmem:[%s2 + $0x60] sm:$0xff]
    %v57 = vld [vmem:[%s2 + $0x68] sm:$0xff]
    %v58 = vld [vmem:[%s2 + $0x70] sm:$0xff]
    %v59 = vld [vmem:[%s2 + $0x78] sm:$0xff]
    %61 = vset.pattern.permute.xlu0 0
    %62 = vperm.xlu0 %61, %v44
    %v63 = vpop.permute.xlu0 %62
    %66 = vset.pattern.permute.xlu0 0
    %67 = vperm.xlu0 %66, %v45
    %v68 = vpop.permute.xlu0 %67
    %71 = vset.pattern.permute.xlu0 0
    %72 = vperm.xlu0 %71, %v46
    %v73 = vpop.permute.xlu0 %72
    %76 = vset.pattern.permute.xlu0 0
    %77 = vperm.xlu0 %76, %v47
    %v78 = vpop.permute.xlu0 %77
    %81 = vset.pattern.permute.xlu0 0
    %82 = vperm.xlu0 %81, %v48
    %v83 = vpop.permute.xlu0 %82
    %86 = vset.pattern.permute.xlu0 0
    %87 = vperm.xlu0 %86, %v49
    %v88 = vpop.permute.xlu0 %87
    %91 = vset.pattern.permute.xlu0 0
    %92 = vperm.xlu0 %91, %v50
    %v93 = vpop.permute.xlu0 %92
    %96 = vset.pattern.permute.xlu0 0
    %97 = vperm.xlu0 %96, %v51
    %v98 = vpop.permute.xlu0 %97
    %101 = vset.pattern.permute.xlu0 0
    %102 = vperm.xlu0 %101, %v52
    %v103 = vpop.permute.xlu0 %102
    %106 = vset.pattern.permute.xlu0 0
    %107 = vperm.xlu0 %106, %v53
    %v108 = vpop.permute.xlu0 %107
    %111 = vset.pattern.permute.xlu0 0
    %112 = vperm.xlu0 %111, %v54
    %v113 = vpop.permute.xlu0 %112
    %116 = vset.pattern.permute.xlu0 0
    %117 = vperm.xlu0 %116, %v55
    %v118 = vpop.permute.xlu0 %117
    %121 = vset.pattern.permute.xlu0 0
    %122 = vperm.xlu0 %121, %v56
    %v123 = vpop.permute.xlu0 %122
    %126 = vset.pattern.permute.xlu0 0
    %127 = vperm.xlu0 %126, %v57
    %v128 = vpop.permute.xlu0 %127
    %131 = vset.pattern.permute.xlu0 0
    %132 = vperm.xlu0 %131, %v58
    %v133 = vpop.permute.xlu0 %132
    %136 = vset.pattern.permute.xlu0 0
    %137 = vperm.xlu0 %136, %v59
    %v138 = vpop.permute.xlu0 %137
    %vm140 = vcmask 64512
    %v142 = vsel %vm140, %v28, 0
    %v145 = vsel %vm140, %v29, 0
    %v148 = vsel %vm140, %v30, 0
    %v151 = vsel %vm140, %v31, 0
    %v154 = vsel %vm140, %v32, 0
    %v157 = vsel %vm140, %v33, 0
    %v160 = vsel %vm140, %v34, 0
    %v163 = vsel %vm140, %v35, 0
    %v166 = vsel %vm140, %v36, 0
    %v169 = vsel %vm140, %v37, 0
    %v172 = vsel %vm140, %v38, 0
    %v175 = vsel %vm140, %v39, 0
    %v178 = vsel %vm140, %v40, 0
    %v181 = vsel %vm140, %v41, 0
    %v184 = vsel %vm140, %v42, 0
    %v187 = vsel %vm140, %v43, 0
    %189 = vmatpush.msra.mxu0 0.0
    %190 = vmatpush.msra.mxu0 0.0
    %191 = vmatpush.msra.mxu0 0.0
    %192 = vmatpush.msra.mxu0 0.0
    %193 = vmatpush.msra.mxu0 0.0
    %194 = vmatpush.msra.mxu0 0.0
    %195 = vmatpush.msra.mxu0 0.0
    %196 = vmatpush.msra.mxu0 0.0
    %197 = vmatpush.msra.mxu0 0.0
    %198 = vmatpush.msra.mxu0 0.0
    %199 = vmatpush.msra.mxu0 0.0
    %200 = vmatpush.msra.mxu0 0.0
    %201 = vmatpush.msra.mxu0 0.0
    %202 = vmatpush.msra.mxu0 0.0
    %203 = vmatpush.msra.mxu0 0.0
    %204 = vmatpush.msra.mxu0 %v27
    %205 = vmatmul.f32.gmra.mxu0 %v142
    %v206 = vpop.f32.mrf.mxu0
    %v207 = vadd.f32 %v63, %v206
    %208 = vmatmul.f32.gmra.mxu0 %v145
    %v209 = vpop.f32.mrf.mxu0
    %v210 = vadd.f32 %v68, %v209
    %211 = vmatmul.f32.gmra.mxu0 %v148
    %v212 = vpop.f32.mrf.mxu0
    %v213 = vadd.f32 %v73, %v212
    %214 = vmatmul.f32.gmra.mxu0 %v151
    %v215 = vpop.f32.mrf.mxu0
    %v216 = vadd.f32 %v78, %v215
    %217 = vmatmul.f32.gmra.mxu0 %v154
    %v218 = vpop.f32.mrf.mxu0
    %v219 = vadd.f32 %v83, %v218
    %220 = vmatmul.f32.gmra.mxu0 %v157
    %v221 = vpop.f32.mrf.mxu0
    %v222 = vadd.f32 %v88, %v221
    %223 = vmatmul.f32.gmra.mxu0 %v160
    %v224 = vpop.f32.mrf.mxu0
    %v225 = vadd.f32 %v93, %v224
    %226 = vmatmul.f32.gmra.mxu0 %v163
    %v227 = vpop.f32.mrf.mxu0
    %v228 = vadd.f32 %v98, %v227
    %229 = vmatmul.f32.gmra.mxu0 %v166
    %v230 = vpop.f32.mrf.mxu0
    %v231 = vadd.f32 %v103, %v230
    %232 = vmatmul.f32.gmra.mxu0 %v169
    %v233 = vpop.f32.mrf.mxu0
    %v234 = vadd.f32 %v108, %v233
    %235 = vmatmul.f32.gmra.mxu0 %v172
    %v236 = vpop.f32.mrf.mxu0
    %v237 = vadd.f32 %v113, %v236
    %238 = vmatmul.f32.gmra.mxu0 %v175
    %v239 = vpop.f32.mrf.mxu0
    %v240 = vadd.f32 %v118, %v239
    %241 = vmatmul.f32.gmra.mxu0 %v178
    %v242 = vpop.f32.mrf.mxu0
    %v243 = vadd.f32 %v123, %v242
    %244 = vmatmul.f32.gmra.mxu0 %v181
    %v245 = vpop.f32.mrf.mxu0
    %v246 = vadd.f32 %v128, %v245
    %247 = vmatmul.f32.gmra.mxu0 %v184
    %v248 = vpop.f32.mrf.mxu0
    %v249 = vadd.f32 %v133, %v248
    %250 = vmatmul.f32.gmra.mxu0 %v187
    %v251 = vpop.f32.mrf.mxu0
    %v252 = vadd.f32 %v138, %v251
    %253 = vdwg.mxu0
    %v254 = vmax.f32 %v207, 0.0
    %v255 = vmax.f32 %v210, 0.0
    %v256 = vmax.f32 %v213, 0.0
    %v257 = vmax.f32 %v216, 0.0
    %v258 = vmax.f32 %v219, 0.0
    %v259 = vmax.f32 %v222, 0.0
    %v260 = vmax.f32 %v225, 0.0
    %v261 = vmax.f32 %v228, 0.0
    %v262 = vmax.f32 %v231, 0.0
    %v263 = vmax.f32 %v234, 0.0
    %v264 = vmax.f32 %v237, 0.0
    %v265 = vmax.f32 %v240, 0.0
    %v266 = vmax.f32 %v243, 0.0
    %v267 = vmax.f32 %v246, 0.0
    %v268 = vmax.f32 %v249, 0.0
    %v269 = vmax.f32 %v252, 0.0
    %v270 = vld [vmem:[%s3] sm:$0xff]
    %v271 = vld [vmem:[%s3 + $0x8] sm:$0xff]
    %v272 = vld [vmem:[%s3 + $0x10] sm:$0xff]
    %v273 = vld [vmem:[%s3 + $0x18] sm:$0xff]
    %v274 = vld [vmem:[%s3 + $0x20] sm:$0xff]
    %v275 = vld [vmem:[%s3 + $0x28] sm:$0xff]
    %v276 = vld [vmem:[%s3 + $0x30] sm:$0xff]
    %v277 = vld [vmem:[%s3 + $0x38] sm:$0xff]
    %v278 = vld [vmem:[%s3 + $0x40] sm:$0xff]
    %v279 = vld [vmem:[%s3 + $0x48] sm:$0xff]
    %v280 = vld [vmem:[%s3 + $0x50] sm:$0xff]
    %v281 = vld [vmem:[%s3 + $0x58] sm:$0xff]
    %v282 = vld [vmem:[%s3 + $0x60] sm:$0xff]
    %v283 = vld [vmem:[%s3 + $0x68] sm:$0xff]
    %v284 = vld [vmem:[%s3 + $0x70] sm:$0xff]
    %v285 = vld [vmem:[%s3 + $0x78] sm:$0xff]
    %v286 = vld [vmem:[%s4] sm:$0xff]
    %v287 = vld [vmem:[%s4 + $0x8] sm:$0xff]
    %v288 = vld [vmem:[%s4 + $0x10] sm:$0xff]
    %v289 = vld [vmem:[%s4 + $0x18] sm:$0xff]
    %v290 = vld [vmem:[%s4 + $0x20] sm:$0xff]
    %v291 = vld [vmem:[%s4 + $0x28] sm:$0xff]
    %v292 = vld [vmem:[%s4 + $0x30] sm:$0xff]
    %v293 = vld [vmem:[%s4 + $0x38] sm:$0xff]
    %v294 = vld [vmem:[%s4 + $0x40] sm:$0xff]
    %v295 = vld [vmem:[%s4 + $0x48] sm:$0xff]
    %v296 = vld [vmem:[%s4 + $0x50] sm:$0xff]
    %v297 = vld [vmem:[%s4 + $0x58] sm:$0xff]
    %v298 = vld [vmem:[%s4 + $0x60] sm:$0xff]
    %v299 = vld [vmem:[%s4 + $0x68] sm:$0xff]
    %v300 = vld [vmem:[%s4 + $0x70] sm:$0xff]
    %v301 = vld [vmem:[%s4 + $0x78] sm:$0xff]
    %303 = vset.pattern.permute.xlu0 0
    %304 = vperm.xlu0 %303, %v286
    %v305 = vpop.permute.xlu0 %304
    %308 = vset.pattern.permute.xlu0 0
    %309 = vperm.xlu0 %308, %v287
    %v310 = vpop.permute.xlu0 %309
    %313 = vset.pattern.permute.xlu0 0
    %314 = vperm.xlu0 %313, %v288
    %v315 = vpop.permute.xlu0 %314
    %318 = vset.pattern.permute.xlu0 0
    %319 = vperm.xlu0 %318, %v289
    %v320 = vpop.permute.xlu0 %319
    %323 = vset.pattern.permute.xlu0 0
    %324 = vperm.xlu0 %323, %v290
    %v325 = vpop.permute.xlu0 %324
    %328 = vset.pattern.permute.xlu0 0
    %329 = vperm.xlu0 %328, %v291
    %v330 = vpop.permute.xlu0 %329
    %333 = vset.pattern.permute.xlu0 0
    %334 = vperm.xlu0 %333, %v292
    %v335 = vpop.permute.xlu0 %334
    %338 = vset.pattern.permute.xlu0 0
    %339 = vperm.xlu0 %338, %v293
    %v340 = vpop.permute.xlu0 %339
    %343 = vset.pattern.permute.xlu0 0
    %344 = vperm.xlu0 %343, %v294
    %v345 = vpop.permute.xlu0 %344
    %348 = vset.pattern.permute.xlu0 0
    %349 = vperm.xlu0 %348, %v295
    %v350 = vpop.permute.xlu0 %349
    %353 = vset.pattern.permute.xlu0 0
    %354 = vperm.xlu0 %353, %v296
    %v355 = vpop.permute.xlu0 %354
    %358 = vset.pattern.permute.xlu0 0
    %359 = vperm.xlu0 %358, %v297
    %v360 = vpop.permute.xlu0 %359
    %363 = vset.pattern.permute.xlu0 0
    %364 = vperm.xlu0 %363, %v298
    %v365 = vpop.permute.xlu0 %364
    %368 = vset.pattern.permute.xlu0 0
    %369 = vperm.xlu0 %368, %v299
    %v370 = vpop.permute.xlu0 %369
    %373 = vset.pattern.permute.xlu0 0
    %374 = vperm.xlu0 %373, %v300
    %v375 = vpop.permute.xlu0 %374
    %378 = vset.pattern.permute.xlu0 0
    %379 = vperm.xlu0 %378, %v301
    %v380 = vpop.permute.xlu0 %379
    %382 = vmatpush.msra.mxu0 %v269
    %383 = vmatpush.msra.mxu0 %v268
    %384 = vmatpush.msra.mxu0 %v267
    %385 = vmatpush.msra.mxu0 %v266
    %386 = vmatpush.msra.mxu0 %v265
    %387 = vmatpush.msra.mxu0 %v264
    %388 = vmatpush.msra.mxu0 %v263
    %389 = vmatpush.msra.mxu0 %v262
    %390 = vmatpush.msra.mxu0 %v261
    %391 = vmatpush.msra.mxu0 %v260
    %392 = vmatpush.msra.mxu0 %v259
    %393 = vmatpush.msra.mxu0 %v258
    %394 = vmatpush.msra.mxu0 %v257
    %395 = vmatpush.msra.mxu0 %v256
    %396 = vmatpush.msra.mxu0 %v255
    %397 = vmatpush.msra.mxu0 %v254
    %398 = vmatmul.f32.gmra.mxu0 %v270
    %v399 = vpop.f32.mrf.mxu0
    %v400 = vadd.f32 %v305, %v399
    %401 = vmatmul.f32.gmra.mxu0 %v271
    %v402 = vpop.f32.mrf.mxu0
    %v403 = vadd.f32 %v310, %v402
    %404 = vmatmul.f32.gmra.mxu0 %v272
    %v405 = vpop.f32.mrf.mxu0
    %v406 = vadd.f32 %v315, %v405
    %407 = vmatmul.f32.gmra.mxu0 %v273
    %v408 = vpop.f32.mrf.mxu0
    %v409 = vadd.f32 %v320, %v408
    %410 = vmatmul.f32.gmra.mxu0 %v274
    %v411 = vpop.f32.mrf.mxu0
    %v412 = vadd.f32 %v325, %v411
    %413 = vmatmul.f32.gmra.mxu0 %v275
    %v414 = vpop.f32.mrf.mxu0
    %v415 = vadd.f32 %v330, %v414
    %416 = vmatmul.f32.gmra.mxu0 %v276
    %v417 = vpop.f32.mrf.mxu0
    %v418 = vadd.f32 %v335, %v417
    %419 = vmatmul.f32.gmra.mxu0 %v277
    %v420 = vpop.f32.mrf.mxu0
    %v421 = vadd.f32 %v340, %v420
    %422 = vmatmul.f32.gmra.mxu0 %v278
    %v423 = vpop.f32.mrf.mxu0
    %v424 = vadd.f32 %v345, %v423
    %425 = vmatmul.f32.gmra.mxu0 %v279
    %v426 = vpop.f32.mrf.mxu0
    %v427 = vadd.f32 %v350, %v426
    %428 = vmatmul.f32.gmra.mxu0 %v280
    %v429 = vpop.f32.mrf.mxu0
    %v430 = vadd.f32 %v355, %v429
    %431 = vmatmul.f32.gmra.mxu0 %v281
    %v432 = vpop.f32.mrf.mxu0
    %v433 = vadd.f32 %v360, %v432
    %434 = vmatmul.f32.gmra.mxu0 %v282
    %v435 = vpop.f32.mrf.mxu0
    %v436 = vadd.f32 %v365, %v435
    %437 = vmatmul.f32.gmra.mxu0 %v283
    %v438 = vpop.f32.mrf.mxu0
    %v439 = vadd.f32 %v370, %v438
    %440 = vmatmul.f32.gmra.mxu0 %v284
    %v441 = vpop.f32.mrf.mxu0
    %v442 = vadd.f32 %v375, %v441
    %443 = vmatmul.f32.gmra.mxu0 %v285
    %v444 = vpop.f32.mrf.mxu0
    %v445 = vadd.f32 %v380, %v444
    %446 = vdwg.mxu0
    %v447 = vmax.f32 %v400, 0.0
    %v448 = vmax.f32 %v403, 0.0
    %v449 = vmax.f32 %v406, 0.0
    %v450 = vmax.f32 %v409, 0.0
    %v451 = vmax.f32 %v412, 0.0
    %v452 = vmax.f32 %v415, 0.0
    %v453 = vmax.f32 %v418, 0.0
    %v454 = vmax.f32 %v421, 0.0
    %v455 = vmax.f32 %v424, 0.0
    %v456 = vmax.f32 %v427, 0.0
    %v457 = vmax.f32 %v430, 0.0
    %v458 = vmax.f32 %v433, 0.0
    %v459 = vmax.f32 %v436, 0.0
    %v460 = vmax.f32 %v439, 0.0
    %v461 = vmax.f32 %v442, 0.0
    %v462 = vmax.f32 %v445, 0.0
    %v463 = vld [vmem:[%s5] sm:$0xff]
    %v464 = vld [vmem:[%s6] sm:$0xff]
    %466 = vset.pattern.permute.xlu0 0
    %467 = vperm.xlu0 %466, %v464
    %v468 = vpop.permute.xlu0 %467
    %470 = vmatpush.msra.mxu0 %v462
    %471 = vmatpush.msra.mxu0 %v461
    %472 = vmatpush.msra.mxu0 %v460
    %473 = vmatpush.msra.mxu0 %v459
    %474 = vmatpush.msra.mxu0 %v458
    %475 = vmatpush.msra.mxu0 %v457
    %476 = vmatpush.msra.mxu0 %v456
    %477 = vmatpush.msra.mxu0 %v455
    %478 = vmatpush.msra.mxu0 %v454
    %479 = vmatpush.msra.mxu0 %v453
    %480 = vmatpush.msra.mxu0 %v452
    %481 = vmatpush.msra.mxu0 %v451
    %482 = vmatpush.msra.mxu0 %v450
    %483 = vmatpush.msra.mxu0 %v449
    %484 = vmatpush.msra.mxu0 %v448
    %485 = vmatpush.msra.mxu0 %v447
    %486 = vmatmul.f32.gmra.mxu0 %v463
    %v487 = vpop.f32.mrf.mxu0
    %v488 = vadd.f32 %v468, %v487
    %489 = vdwg.mxu0
    %490 = vst [vmem:[#allocation2] sm:$0xff] %v488
    // Predicated region
    $region30: #{tpu_custom_call.1} parent=1 // pred_check
      _
    $region31: #{tpu_custom_call.1} parent=1 // pred_check_branch
      %492 = sbr.rel (0) target = $region33
    $region32: #{tpu_custom_call.1} parent=1 // pred_region
      %494 = vsyncadd [#allocation3], 0
      %s496 = sshll.u32 [#allocation2], 4
      %s497 = int_to_ptr.vmem [resolvable:$true] %s496
      %s498 = sshll.u32 %s7, 4
      %s499 = int_to_ptr.hbm [resolvable:$true] %s498
      %501 = dma.vmem_to_hbm [thread:$0]  %s497, 128, %s499, [#allocation3]
    $region33: #{tpu_custom_call.1} parent=1 // pred_fallthru
      _
    // Predicated region
    $region34: #{tpu_custom_call.1} parent=1 // pred_check
      _
    $region35: #{tpu_custom_call.1} parent=1 // pred_check_branch
      %503 = sbr.rel (0) target = $region37
    $region36: #{tpu_custom_call.1} parent=1 // pred_region
      %505 = dma.done [#allocation3], 128
    $region37: #{tpu_custom_call.1} parent=1 // pred_fallthru
      _
    %506 = vsyncpa [#allocation3], 1

</llo_original>
